<compile_context>
chip_gen: v7x
topology: tpu7x:2x2x1
jax: 0.10.0
libtpu: 0.0.40
codegen_flags: <defaults>
</compile_context>

<pallas_src>
import functools

import jax
import jax.numpy as jnp
from jax.experimental import pallas as pl
from jax.experimental.pallas import tpu as pltpu


def _round_up(x, m):
    return ((x + m - 1) // m) * m


def _vmem_cap_bytes():
    """Generation-aware scoped-VMEM budget (leave headroom under physical)."""
    try:
        info = pltpu.get_tpu_info()
        phys = getattr(info, "vmem_capacity_bytes", None)
        if phys is not None:
            if phys <= (64 << 20):      # v7x: 64 MiB physical per TensorCore
                return 48 << 20
            return 96 << 20             # v5e / v6e: 128 MiB physical
    except Exception:
        pass
    return 48 << 20                     # conservative fallback, safe everywhere


def _conv1d_kernel(xl_ref, xm_ref, xr_ref, w_ref, b_ref, o_ref, xext_ref, *,
                   K, dilation, pad, HB, TL, L):
    # xl_ref : (1, C_in, HB)      left-halo block  = x[l*TL - HB : l*TL] (clamped)
    # xm_ref : (1, C_in, TL)      main tile        = x[l*TL : l*TL + TL]
    # xr_ref : (1, C_in, HB)      right-halo block = x[l*TL + TL : +HB]  (clamped)
    # w_ref  : (K, C_out, C_in)   weight-normed filter taps
    # b_ref  : (C_out, 1)         bias (f32)
    # o_ref  : (1, C_out, TL)     output tile (lane dim = time -> dense stores)
    # xext_ref: (C_in, TL+2*HB)   extended window; column j holds input index
    #                             l*TL - HB + j (zero where out of range).
    l = pl.program_id(1)
    c_in = xm_ref.shape[1]
    c_out = w_ref.shape[1]
    EW = TL + 2 * HB

    # Assemble the extended window once (single tile-sized VMEM store per step,
    # instead of the (K+1) concat copies of the previous version).
    xext_ref[:, 0:HB] = xl_ref[0]
    xext_ref[:, HB:HB + TL] = xm_ref[0]
    xext_ref[:, HB + TL:EW] = xr_ref[0]

    # Left 'same' padding: on the first tile the left-halo columns are indices < 0.
    @pl.when(l == 0)
    def _():
        xext_ref[:, 0:HB] = jnp.zeros((c_in, HB), xext_ref.dtype)

    # Right 'same' padding / ragged last tile / clamped right halo: zero every
    # column whose input index is >= L. Only edge tiles take this branch.
    @pl.when(l * TL + TL + HB > L)
    def _():
        col = jax.lax.broadcasted_iota(jnp.int32, (c_in, EW), 1)
        limit = L - l * TL + HB
        xext_ref[...] = jnp.where(col < limit, xext_ref[...], 0)

    # K accumulating dots over slices of the extended window (no concats).
    acc = jnp.zeros((c_out, TL), jnp.float32)
    for k in range(K):
        s = HB - pad + k * dilation            # static Python int
        acc = acc + jnp.dot(w_ref[k], xext_ref[:, pl.ds(s, TL)],
                            preferred_element_type=jnp.float32)

    o_ref[0] = (acc + b_ref[...]).astype(o_ref.dtype)


def conv1d_pallas(x_ncl, weight, bias, dilation=1, tile_l=None, compute_dtype=None):
    """Conv1d with 'same' padding, matching torch Conv1d(..., padding=d*(K-1)//2).

    x_ncl:  (N, C_in, L)
    weight: (C_out, C_in, K)   (already weight-normed)
    bias:   (C_out,)
    """
    N, C_in, L = x_ncl.shape
    C_out, _, K = weight.shape
    assert K % 2 == 1, "symmetric 'same' padding needs odd kernel_size (module uses K=3)"
    pad = dilation * (K - 1) // 2
    HB = max(128, _round_up(max(pad, 1), 128))     # lane-aligned halo block width

    cdt = jnp.dtype(compute_dtype) if compute_dtype is not None else jnp.dtype(x_ncl.dtype)
    out_dtype = x_ncl.dtype
    csz = jnp.dtype(cdt).itemsize
    osz = jnp.dtype(out_dtype).itemsize

    cap = _vmem_cap_bytes()

    # Time-tile: large (amortizes per-step overhead), multiple of HB, VMEM-bounded.
    if tile_l is None:
        tile_l = 4096
    TL = _round_up(min(max(tile_l, HB), _round_up(L, HB)), HB)
    if N == 1 and L > HB:
        # v7x has 2 TensorCores -> keep at least 2 parallel grid steps.
        TL = min(TL, max(HB, _round_up(pl.cdiv(L, 2), HB)))

    def vmem_need(tl):
        ew = tl + 2 * HB
        return (2 * C_in * ew * csz            # double-buffered x tile + halos
                + 2 * C_out * tl * osz         # double-buffered output tiles
                + C_in * ew * csz              # extended-window scratch
                + C_out * tl * 4               # f32 accumulator
                + K * C_in * tl * csz          # tap operand materialization
                + 2 * (K * C_out * C_in * csz + C_out * 4))

    while TL > HB and vmem_need(TL) > cap - (8 << 20):
        TL = max(HB, _round_up(TL // 2, HB))

    nL = pl.cdiv(L, TL)
    stride = TL // HB                          # halo-block-index stride
    last_hb = max(pl.cdiv(L, HB) - 1, 0)       # last valid HB-block of the L axis
    EW = TL + 2 * HB

    x_in = x_ncl if cdt == x_ncl.dtype else x_ncl.astype(cdt)
    w_stk = jnp.transpose(weight, (2, 0, 1)).astype(cdt)       # (K, C_out, C_in)
    b2 = bias.reshape(C_out, 1).astype(jnp.float32)

    kernel = functools.partial(_conv1d_kernel, K=K, dilation=dilation, pad=pad,
                               HB=HB, TL=TL, L=L)

    return pl.pallas_call(
        kernel,
        out_shape=jax.ShapeDtypeStruct((N, C_out, L), out_dtype),
        grid=(N, nL),
        in_specs=[
            # left halo: HB columns just before the tile (clamped to block 0 at l==0)
            pl.BlockSpec((1, C_in, HB),
                         lambda n, l: (n, 0, jnp.maximum(l * stride - 1, 0))),
            # main tile
            pl.BlockSpec((1, C_in, TL), lambda n, l: (n, 0, l)),
            # right halo: HB columns just after the tile (clamped to the last block)
            pl.BlockSpec((1, C_in, HB),
                         lambda n, l: (n, 0, jnp.minimum((l + 1) * stride, last_hb))),
            # filter / bias: constant index -> DMA'd once, VMEM-resident
            pl.BlockSpec((K, C_out, C_in), lambda n, l: (0, 0, 0)),
            pl.BlockSpec((C_out, 1), lambda n, l: (0, 0)),
        ],
        out_specs=pl.BlockSpec((1, C_out, TL), lambda n, l: (n, 0, l)),
        scratch_shapes=[pltpu.VMEM((C_in, EW), cdt)],
        compiler_params=pltpu.CompilerParams(
            dimension_semantics=("parallel", "parallel"),
            vmem_limit_bytes=int(cap),
        ),
    )(x_in, x_in, x_in, w_stk, b2)


def make_params(key, in_channels, out_channels, kernel_size=3):
    """Deterministic synthetic params mirroring weight_norm(Conv1d(...)).

    weight_norm: w[o] = g[o] * v[o] / ||v[o]||_2  (norm over (in_ch, K) dims).
    (The kaiming init on the wrapped .weight is overwritten by the weight_norm
    pre-forward hook, so it does not affect the forward pass.)
    """
    kv, kg, kb = jax.random.split(key, 3)
    v = jax.random.normal(kv, (out_channels, in_channels, kernel_size), jnp.float32)
    g = jax.random.normal(kg, (out_channels,), jnp.float32) * 0.1 + 1.0
    bias = jax.random.normal(kb, (out_channels,), jnp.float32) * 0.05
    v_norm = jnp.sqrt(jnp.sum(v * v, axis=(1, 2), keepdims=True))
    weight = g[:, None, None] * v / v_norm
    return weight, bias


if __name__ == "__main__":
    key = jax.random.PRNGKey(0)
    k_x, k_p, k_x2 = jax.random.split(key, 3)

    N, C_in, C_out, L = 2, 4, 8, 16
    kernel_size = 3

    x = jax.random.normal(k_x, (N, C_in, L), jnp.float32)
    weight, bias = make_params(k_p, C_in, C_out, kernel_size)

    def torch_ref(xr, wr, br, dilation):
        p = dilation * (kernel_size - 1) // 2
        return jax.lax.conv_general_dilated(
            xr, wr, window_strides=(1,), padding=[(p, p)],
            rhs_dilation=(dilation,),
            dimension_numbers=("NCH", "OIH", "NCH"),
        ) + br[None, :, None]

    # Tolerances allow for possible bf16-pass MXU matmuls on real hardware;
    # indexing/masking bugs would produce O(0.1-1) errors and still be caught.
    TOL = dict(atol=2e-2, rtol=2e-2)

    # 1) module defaults (dilation=1), f32
    out = jax.block_until_ready(conv1d_pallas(x, weight, bias, dilation=1))
    ref = torch_ref(x, weight, bias, 1)
    assert out.shape == (N, C_out, L)
    assert jnp.allclose(out, ref, **TOL), "dilation=1 f32 mismatch vs reference"

    # 2) dilation=2 + bf16 streamed operands (f32 accumulation)
    out_bf = jax.block_until_ready(
        conv1d_pallas(x, weight, bias, dilation=2, compute_dtype=jnp.bfloat16))
    x_r = x.astype(jnp.bfloat16).astype(jnp.float32)
    w_r = weight.astype(jnp.bfloat16).astype(jnp.float32)
    ref_bf = torch_ref(x_r, w_r, bias, 2)
    assert out_bf.shape == (N, C_out, L)
    assert jnp.allclose(out_bf, ref_bf, **TOL), "dilation=2 bf16 mismatch vs reference"

    # 3) multi-tile grid + ragged last tile + halo paths (L not a tile multiple)
    L2 = 300
    x2 = jax.random.normal(k_x2, (N, C_in, L2), jnp.float32)
    out2 = jax.block_until_ready(conv1d_pallas(x2, weight, bias, dilation=1, tile_l=128))
    ref2 = torch_ref(x2, weight, bias, 1)
    assert out2.shape == (N, C_out, L2)
    assert jnp.allclose(out2, ref2, **TOL), "multi-tile mismatch vs reference"

    print("KERNEL_OK")
</pallas_src>

<mosaic_0001>
module attributes {stable_mosaic.version = 11 : i64} {
  func.func @_conv1d_kernel(%arg0: i32, %arg1: i32, %arg2: memref<1x4x128xf32, #tpu.memory_space<vmem>>, %arg3: memref<1x4x128xf32, #tpu.memory_space<vmem>>, %arg4: memref<1x4x128xf32, #tpu.memory_space<vmem>>, %arg5: memref<3x8x4xf32, #tpu.memory_space<vmem>>, %arg6: memref<8x1xf32, #tpu.memory_space<vmem>>, %arg7: memref<1x8x128xf32, #tpu.memory_space<vmem>>, %arg8: memref<4x384xf32, #tpu.memory_space<vmem>>) attributes {dimension_semantics = [#tpu.dimension_semantics<parallel>, #tpu.dimension_semantics<parallel>], iteration_bounds = array<i64: 2, 1>, scalar_prefetch = 0 : i64, scratch_operands = 1 : i64, tpu.core_type = #tpu.core_type<tc>, window_params = [{transform_indices = @transform_0, window_bounds = array<i64: 1, 4, 128>}, {transform_indices = @transform_1, window_bounds = array<i64: 1, 4, 128>}, {transform_indices = @transform_2, window_bounds = array<i64: 1, 4, 128>}, {pipeline_mode = #tpu.pipeline_mode<synchronous>, transform_indices = @transform_3, window_bounds = array<i64: 3, 8, 4>}, {pipeline_mode = #tpu.pipeline_mode<synchronous>, transform_indices = @transform_4, window_bounds = array<i64: 8, 1>}, {transform_indices = @transform_5, window_bounds = array<i64: 1, 8, 128>}]} {
    %c0 = arith.constant 0 : index
    %c0_0 = arith.constant 0 : index
    %c0_1 = arith.constant 0 : index
    %0 = vector.load %arg2[%c0, %c0_0, %c0_1] : memref<1x4x128xf32, #tpu.memory_space<vmem>>, vector<1x4x128xf32>
    %1 = vector.shape_cast %0 : vector<1x4x128xf32> to vector<4x128xf32>
    %c0_2 = arith.constant 0 : index
    %c0_3 = arith.constant 0 : index
    %2 = vector.load %arg8[%c0_2, %c0_3] : memref<4x384xf32, #tpu.memory_space<vmem>>, vector<4x128xf32>
    tpu.vector_store %arg8[%c0_2, %c0_3], %1 {strides = array<i32>} : memref<4x384xf32, #tpu.memory_space<vmem>>, vector<4x128xf32>,
    %c0_4 = arith.constant 0 : index
    %c0_5 = arith.constant 0 : index
    %c0_6 = arith.constant 0 : index
    %3 = vector.load %arg3[%c0_4, %c0_5, %c0_6] : memref<1x4x128xf32, #tpu.memory_space<vmem>>, vector<1x4x128xf32>
    %4 = vector.shape_cast %3 : vector<1x4x128xf32> to vector<4x128xf32>
    %c0_7 = arith.constant 0 : index
    %c128 = arith.constant 128 : index
    %5 = vector.load %arg8[%c0_7, %c128] : memref<4x384xf32, #tpu.memory_space<vmem>>, vector<4x128xf32>
    tpu.vector_store %arg8[%c0_7, %c128], %4 {strides = array<i32>} : memref<4x384xf32, #tpu.memory_space<vmem>>, vector<4x128xf32>,
    %c0_8 = arith.constant 0 : index
    %c0_9 = arith.constant 0 : index
    %c0_10 = arith.constant 0 : index
    %6 = vector.load %arg4[%c0_8, %c0_9, %c0_10] : memref<1x4x128xf32, #tpu.memory_space<vmem>>, vector<1x4x128xf32>
    %7 = vector.shape_cast %6 : vector<1x4x128xf32> to vector<4x128xf32>
    %c0_11 = arith.constant 0 : index
    %c256 = arith.constant 256 : index
    %8 = vector.load %arg8[%c0_11, %c256] : memref<4x384xf32, #tpu.memory_space<vmem>>, vector<4x128xf32>
    tpu.vector_store %arg8[%c0_11, %c256], %7 {strides = array<i32>} : memref<4x384xf32, #tpu.memory_space<vmem>>, vector<4x128xf32>,
    %c0_i32 = arith.constant 0 : i32
    %9 = arith.cmpi eq, %arg1, %c0_i32 : i32
    %10 = arith.extui %9 : i1 to i32
    %c0_i32_12 = arith.constant 0 : i32
    %11 = arith.cmpi ne, %10, %c0_i32_12 : i32
    scf.if %11 {
      %cst_35 = arith.constant 0.000000e+00 : f32
      %40 = vector.broadcast %cst_35 : f32 to vector<4x128xf32>
      %c0_36 = arith.constant 0 : index
      %c0_37 = arith.constant 0 : index
      %41 = vector.load %arg8[%c0_36, %c0_37] : memref<4x384xf32, #tpu.memory_space<vmem>>, vector<4x128xf32>
      tpu.vector_store %arg8[%c0_36, %c0_37], %40 {strides = array<i32>} : memref<4x384xf32, #tpu.memory_space<vmem>>, vector<4x128xf32>,
    } else {
    }
    %c128_i32 = arith.constant 128 : i32
    %12 = arith.muli %arg1, %c128_i32 : i32
    %c128_i32_13 = arith.constant 128 : i32
    %13 = arith.addi %12, %c128_i32_13 : i32
    %c128_i32_14 = arith.constant 128 : i32
    %14 = arith.addi %13, %c128_i32_14 : i32
    %c16_i32 = arith.constant 16 : i32
    %15 = arith.cmpi sgt, %14, %c16_i32 : i32
    %16 = arith.extui %15 : i1 to i32
    %c0_i32_15 = arith.constant 0 : i32
    %17 = arith.cmpi ne, %16, %c0_i32_15 : i32
    scf.if %17 {
      %40 = tpu.iota {dimensions = array<i32: 1>} : vector<4x384xi32>
      %c128_i32_35 = arith.constant 128 : i32
      %41 = arith.muli %arg1, %c128_i32_35 : i32
      %c16_i32_36 = arith.constant 16 : i32
      %42 = arith.subi %c16_i32_36, %41 : i32
      %c128_i32_37 = arith.constant 128 : i32
      %43 = arith.addi %42, %c128_i32_37 : i32
      %44 = vector.broadcast %43 : i32 to vector<4x384xi32>
      %45 = arith.cmpi slt, %40, %44 : vector<4x384xi32>
      %c0_38 = arith.constant 0 : index
      %c0_39 = arith.constant 0 : index
      %46 = vector.load %arg8[%c0_38, %c0_39] : memref<4x384xf32, #tpu.memory_space<vmem>>, vector<4x384xf32>
      %c0_i32_40 = arith.constant 0 : i32
      %47 = arith.sitofp %c0_i32_40 : i32 to f32
      %48 = vector.broadcast %47 : f32 to vector<4x384xf32>
      %49 = arith.select %45, %46, %48 : vector<4x384xi1>, vector<4x384xf32>
      %c0_41 = arith.constant 0 : index
      %c0_42 = arith.constant 0 : index
      %50 = vector.load %arg8[%c0_41, %c0_42] : memref<4x384xf32, #tpu.memory_space<vmem>>, vector<4x384xf32>
      tpu.vector_store %arg8[%c0_41, %c0_42], %49 {strides = array<i32>} : memref<4x384xf32, #tpu.memory_space<vmem>>, vector<4x384xf32>,
    } else {
    }
    %cst = arith.constant 0.000000e+00 : f32
    %18 = vector.broadcast %cst : f32 to vector<8x128xf32>
    %c0_16 = arith.constant 0 : index
    %c0_17 = arith.constant 0 : index
    %c0_18 = arith.constant 0 : index
    %19 = vector.load %arg5[%c0_16, %c0_17, %c0_18] : memref<3x8x4xf32, #tpu.memory_space<vmem>>, vector<1x8x4xf32>
    %20 = vector.shape_cast %19 : vector<1x8x4xf32> to vector<8x4xf32>
    %c0_19 = arith.constant 0 : index
    %c127 = arith.constant 127 : index
    %21 = vector.load %arg8[%c0_19, %c127] : memref<4x384xf32, #tpu.memory_space<vmem>>, vector<4x128xf32>
    %cst_20 = arith.constant dense<0.000000e+00> : vector<8x128xf32>
    %22 = tpu.matmul %20, %21, %cst_20 {dimension_numbers = #tpu.dot_dimension_numbers<[1], [0], [0], [1], [0, 0, 1, 1], [], []>} : vector<8x4xf32>, vector<4x128xf32>, vector<8x128xf32> -> vector<8x128xf32>
    %23 = arith.addf %18, %22 : vector<8x128xf32>
    %c1 = arith.constant 1 : index
    %c0_21 = arith.constant 0 : index
    %c0_22 = arith.constant 0 : index
    %24 = vector.load %arg5[%c1, %c0_21, %c0_22] : memref<3x8x4xf32, #tpu.memory_space<vmem>>, vector<1x8x4xf32>
    %25 = vector.shape_cast %24 : vector<1x8x4xf32> to vector<8x4xf32>
    %c0_23 = arith.constant 0 : index
    %c128_24 = arith.constant 128 : index
    %26 = vector.load %arg8[%c0_23, %c128_24] : memref<4x384xf32, #tpu.memory_space<vmem>>, vector<4x128xf32>
    %cst_25 = arith.constant dense<0.000000e+00> : vector<8x128xf32>
    %27 = tpu.matmul %25, %26, %cst_25 {dimension_numbers = #tpu.dot_dimension_numbers<[1], [0], [0], [1], [0, 0, 1, 1], [], []>} : vector<8x4xf32>, vector<4x128xf32>, vector<8x128xf32> -> vector<8x128xf32>
    %28 = arith.addf %23, %27 : vector<8x128xf32>
    %c2 = arith.constant 2 : index
    %c0_26 = arith.constant 0 : index
    %c0_27 = arith.constant 0 : index
    %29 = vector.load %arg5[%c2, %c0_26, %c0_27] : memref<3x8x4xf32, #tpu.memory_space<vmem>>, vector<1x8x4xf32>
    %30 = vector.shape_cast %29 : vector<1x8x4xf32> to vector<8x4xf32>
    %c0_28 = arith.constant 0 : index
    %c129 = arith.constant 129 : index
    %31 = vector.load %arg8[%c0_28, %c129] : memref<4x384xf32, #tpu.memory_space<vmem>>, vector<4x128xf32>
    %cst_29 = arith.constant dense<0.000000e+00> : vector<8x128xf32>
    %32 = tpu.matmul %30, %31, %cst_29 {dimension_numbers = #tpu.dot_dimension_numbers<[1], [0], [0], [1], [0, 0, 1, 1], [], []>} : vector<8x4xf32>, vector<4x128xf32>, vector<8x128xf32> -> vector<8x128xf32>
    %33 = arith.addf %28, %32 : vector<8x128xf32>
    %c0_30 = arith.constant 0 : index
    %c0_31 = arith.constant 0 : index
    %34 = vector.load %arg6[%c0_30, %c0_31] : memref<8x1xf32, #tpu.memory_space<vmem>>, vector<8x1xf32>
    %35 = vector.broadcast %34 : vector<8x1xf32> to vector<8x128xf32>
    %36 = arith.addf %33, %35 : vector<8x128xf32>
    %c0_32 = arith.constant 0 : index
    %c0_33 = arith.constant 0 : index
    %c0_34 = arith.constant 0 : index
    %37 = vector.load %arg7[%c0_32, %c0_33, %c0_34] : memref<1x8x128xf32, #tpu.memory_space<vmem>>, vector<1x8x128xf32>
    %38 = vector.shape_cast %37 : vector<1x8x128xf32> to vector<8x128xf32>
    %39 = vector.shape_cast %36 : vector<8x128xf32> to vector<1x8x128xf32>
    tpu.vector_store %arg7[%c0_32, %c0_33, %c0_34], %39 {strides = array<i32>} : memref<1x8x128xf32, #tpu.memory_space<vmem>>, vector<1x8x128xf32>,
    return
  }
  func.func @transform_0(%arg0: i32, %arg1: i32) -> (i32, i32, i32) {
    %c1_i32 = arith.constant 1 : i32
    %0 = arith.muli %arg1, %c1_i32 : i32
    %c1_i32_0 = arith.constant 1 : i32
    %1 = arith.subi %0, %c1_i32_0 : i32
    %c0_i32 = arith.constant 0 : i32
    %2 = arith.maxsi %1, %c0_i32 : i32
    %c0_i32_1 = arith.constant 0 : i32
    %c0_i32_2 = arith.constant 0 : i32
    return %arg0, %c0_i32_1, %2 : i32, i32, i32
  }
  func.func @transform_1(%arg0: i32, %arg1: i32) -> (i32, i32, i32) {
    %c0_i32 = arith.constant 0 : i32
    %c0_i32_0 = arith.constant 0 : i32
    return %arg0, %c0_i32, %arg1 : i32, i32, i32
  }
  func.func @transform_2(%arg0: i32, %arg1: i32) -> (i32, i32, i32) {
    %c1_i32 = arith.constant 1 : i32
    %0 = arith.addi %arg1, %c1_i32 : i32
    %c1_i32_0 = arith.constant 1 : i32
    %1 = arith.muli %0, %c1_i32_0 : i32
    %c0_i32 = arith.constant 0 : i32
    %2 = arith.minsi %1, %c0_i32 : i32
    %c0_i32_1 = arith.constant 0 : i32
    %c0_i32_2 = arith.constant 0 : i32
    return %arg0, %c0_i32_1, %2 : i32, i32, i32
  }
  func.func @transform_3(%arg0: i32, %arg1: i32) -> (i32, i32, i32) {
    %c0_i32 = arith.constant 0 : i32
    %c0_i32_0 = arith.constant 0 : i32
    %c0_i32_1 = arith.constant 0 : i32
    %c0_i32_2 = arith.constant 0 : i32
    return %c0_i32, %c0_i32_0, %c0_i32_1 : i32, i32, i32
  }
  func.func @transform_4(%arg0: i32, %arg1: i32) -> (i32, i32) {
    %c0_i32 = arith.constant 0 : i32
    %c0_i32_0 = arith.constant 0 : i32
    %c0_i32_1 = arith.constant 0 : i32
    return %c0_i32, %c0_i32_0 : i32, i32
  }
  func.func @transform_5(%arg0: i32, %arg1: i32) -> (i32, i32, i32) {
    %c0_i32 = arith.constant 0 : i32
    %c0_i32_0 = arith.constant 0 : i32
    return %arg0, %c0_i32, %arg1 : i32, i32, i32
  }
}

</mosaic_0001>

<llo_original>
// kernel: tpu_custom_call.1
$region0: #{tpu_custom_call.1}
  #allocation0 [shape = 'u32[]', space=smem, size = 0x4, offset = 0x4, fixed_abs, tag = 'smem constant byte address 0x4 - core index']
  #allocation1 [shape = 'u32[144,128]{1,0:T(1,128)}', space=vmem, size = 0x12000, scoped, tag = 'internal scratch']
  #allocation2 [shape = 'f32[4,384]{1,0:T(4,128)}', space=vmem, size = 0x1800, scoped, tag = 'scratch operand']
  %s0 = inlined_call_operand.vmem [shape: f32[2,4,16], index: 0, kind: input, shape index: {}]
  %s1 = inlined_call_operand.vmem [shape: f32[2,4,16], index: 1, kind: input, shape index: {}]
  %s2 = inlined_call_operand.vmem [shape: f32[2,4,16], index: 2, kind: input, shape index: {}]
  %s3 = inlined_call_operand.vmem [shape: f32[3,8,4], index: 3, kind: input, shape index: {}]
  %s4 = inlined_call_operand.vmem [shape: f32[8,1], index: 4, kind: input, shape index: {}]
  %s5 = inlined_call_operand.hbm [shape: f32[2,8,16], index: 5, kind: output, shape index: {}]
  %s6 = sld [smem:[#allocation0]]
  $region61: #{tpu_custom_call.1} parent=0
    _
  %s8 = ssub.s32 1, %s6
  %s9 = scalar_select 0, %s8, %s6
  $region1: #{tpu_custom_call.1} parent=0
    #allocation3 [shape = 'u8[8192]{0}', space=vmem, size = 0x2000, scoped, tag = 'output window, operand 0']
    #allocation4 [shape = 's32[2]{0}', space=sflag, size = 0x8, scoped, tag = 'scoped memory for tpu_custom_call.1']
    %10 = vsyncpa [#allocation4], 0
    %s11 = scalar_lea.sflag [#allocation4], 1
    %12 = vsyncpa %s11, 0
    loop: start=0, step=1, limit=4
    $region2: #{tpu_custom_call.1} parent=1 // loop_pre_header
      _
    $region3: #{tpu_custom_call.1} parent=1 // loop_header
      %s14 = sphi 0, %s18
      %p15 = scmp.ge.s32.totalorder %s14, 4
      %s21 = sphi 0, %s33
      %s22 = sphi 0, %s29
      %s23 = sphi 0, %s21
      %s24 = sphi 0, %s22
      %s25 = sphi 0, %s23
      %s26 = sphi 0, %s24
      %s44 = sphi 0, %s46
      %s47 = sphi 0, %s44
      %s48 = sphi 0, %s47
      %s64 = sphi 0, %s48
      %s72 = sphi 0, %s74
      %s75 = sphi 0, %s72
      %s76 = sphi 0, %s75
      %s92 = sphi 0, %s76
      %s106 = sphi 0, %s108
      %s109 = sphi 0, %s106
      %s110 = sphi 0, %s109
      %s126 = sphi 0, %s110
      %s130 = sphi 0, %s130
      %s132 = sphi 0, %s130
      %s133 = sphi 0, %s132
      %s147 = sphi 0, %s133
      %s151 = sphi 0, %s151
      %s153 = sphi 0, %s151
      %s154 = sphi 0, %s153
      %s168 = sphi 0, %s154
      %s176 = sphi 0, %s178
      %s179 = sphi 0, %s176
      %s180 = sphi 0, %s179
      %s196 = sphi 0, %s180
    $region4: #{tpu_custom_call.1} parent=1 // loop_header_branch
      %17 = sbr.rel (%p15) target = $region8
    $region5: #{tpu_custom_call.1} parent=1 // loop_body
      %s19 = ssub.s32 %s14, 1
      %s20 = ssub.s32 %s14, 2
      %s27 = sadd.s32 1, %s22
      %p28 = scmp.ge.s32.totalorder %s27, 1
      %s29 = scalar_select %p28, 0, %s27
      %s30 = sadd.s32 1, %s21
      %s31 = scalar_select %p28, %s30, %s21
      %p32 = scmp.ge.s32.totalorder %s31, 2
      %s33 = scalar_select %p32, 0, %s31
      %s34 = ssub.s32 %s22, 1
      %p35 = scmp.gt.s32.totalorder %s34, 0
      %s36 = scalar_select %p35, %s34, 0
      %s37 = ssub.s32 %s29, 1
      %p38 = scmp.gt.s32.totalorder %s37, 0
      %s39 = scalar_select %p38, %s37, 0
      %s40 = ssub.s32 %s21, %s33
      %s41 = ssub.s32 %s36, %s39
      %s42 = sor.u32 %s40, %s41
      %p43 = scmp.eq.s32.totalorder %s42, 0
      %s45 = sadd.s32 %s44, 1
      %s46 = scalar_select %p43, %s44, %s45
      %p49 = pneg %p43
      %p50 = scmp.eq.s32.totalorder %s14, 1
      %p51 = por %p49, %p50
      %p52 = scmp.ne.s32.totalorder %s44, %s47
      %p53 = scmp.eq.s32.totalorder %s14, 0
      %p54 = por %p52, %p53
      %p55 = scmp.ne.s32.totalorder %s44, %s47
      %p56 = scmp.eq.s32.totalorder %s19, 1
      %p57 = por %p55, %p56
      %p58 = scmp.ne.s32.totalorder %s47, %s48
      %p59 = scmp.eq.s32.totalorder %s19, 0
      %p60 = por %p58, %p59
      %p61 = scmp.ne.s32.totalorder %s47, %s48
      %p62 = scmp.eq.s32.totalorder %s20, 1
      %p63 = por %p61, %p62
      %p65 = scmp.ne.s32.totalorder %s48, %s64
      %p66 = scmp.eq.s32.totalorder %s20, 0
      %p67 = por %p65, %p66
      %s68 = ssub.s32 %s21, %s33
      %s69 = ssub.s32 %s22, %s29
      %s70 = sor.u32 %s68, %s69
      %p71 = scmp.eq.s32.totalorder %s70, 0
      %s73 = sadd.s32 %s72, 1
      %s74 = scalar_select %p71, %s72, %s73
      %p77 = pneg %p71
      %p78 = scmp.eq.s32.totalorder %s14, 1
      %p79 = por %p77, %p78
      %p80 = scmp.ne.s32.totalorder %s72, %s75
      %p81 = scmp.eq.s32.totalorder %s14, 0
      %p82 = por %p80, %p81
      %p83 = scmp.ne.s32.totalorder %s72, %s75
      %p84 = scmp.eq.s32.totalorder %s19, 1
      %p85 = por %p83, %p84
      %p86 = scmp.ne.s32.totalorder %s75, %s76
      %p87 = scmp.eq.s32.totalorder %s19, 0
      %p88 = por %p86, %p87
      %p89 = scmp.ne.s32.totalorder %s75, %s76
      %p90 = scmp.eq.s32.totalorder %s20, 1
      %p91 = por %p89, %p90
      %p93 = scmp.ne.s32.totalorder %s76, %s92
      %p94 = scmp.eq.s32.totalorder %s20, 0
      %p95 = por %p93, %p94
      %s96 = sadd.s32 %s22, 1
      %p97 = scmp.lt.s32.totalorder %s96, 0
      %s98 = scalar_select %p97, %s96, 0
      %s99 = sadd.s32 %s29, 1
      %p100 = scmp.lt.s32.totalorder %s99, 0
      %s101 = scalar_select %p100, %s99, 0
      %s102 = ssub.s32 %s21, %s33
      %s103 = ssub.s32 %s98, %s101
      %s104 = sor.u32 %s102, %s103
      %p105 = scmp.eq.s32.totalorder %s104, 0
      %s107 = sadd.s32 %s106, 1
      %s108 = scalar_select %p105, %s106, %s107
      %p111 = pneg %p105
      %p112 = scmp.eq.s32.totalorder %s14, 1
      %p113 = por %p111, %p112
      %p114 = scmp.ne.s32.totalorder %s106, %s109
      %p115 = scmp.eq.s32.totalorder %s14, 0
      %p116 = por %p114, %p115
      %p117 = scmp.ne.s32.totalorder %s106, %s109
      %p118 = scmp.eq.s32.totalorder %s19, 1
      %p119 = por %p117, %p118
      %p120 = scmp.ne.s32.totalorder %s109, %s110
      %p121 = scmp.eq.s32.totalorder %s19, 0
      %p122 = por %p120, %p121
      %p123 = scmp.ne.s32.totalorder %s109, %s110
      %p124 = scmp.eq.s32.totalorder %s20, 1
      %p125 = por %p123, %p124
      %p127 = scmp.ne.s32.totalorder %s110, %s126
      %p128 = scmp.eq.s32.totalorder %s20, 0
      %p129 = por %p127, %p128
      %s131 = sadd.s32 %s130, 1
      %p134 = scmp.eq.s32.totalorder %s14, 1
      %p135 = scmp.ne.s32.totalorder %s130, %s132
      %p136 = scmp.eq.s32.totalorder %s14, 0
      %p137 = por %p135, %p136
      %p138 = scmp.ne.s32.totalorder %s130, %s132
      %p139 = scmp.eq.s32.totalorder %s19, 1
      %p140 = por %p138, %p139
      %p141 = scmp.ne.s32.totalorder %s132, %s133
      %p142 = scmp.eq.s32.totalorder %s19, 0
      %p143 = por %p141, %p142
      %p144 = scmp.ne.s32.totalorder %s132, %s133
      %p145 = scmp.eq.s32.totalorder %s20, 1
      %p146 = por %p144, %p145
      %p148 = scmp.ne.s32.totalorder %s133, %s147
      %p149 = scmp.eq.s32.totalorder %s20, 0
      %p150 = por %p148, %p149
      %s152 = sadd.s32 %s151, 1
      %p155 = scmp.eq.s32.totalorder %s14, 1
      %p156 = scmp.ne.s32.totalorder %s151, %s153
      %p157 = scmp.eq.s32.totalorder %s14, 0
      %p158 = por %p156, %p157
      %p159 = scmp.ne.s32.totalorder %s151, %s153
      %p160 = scmp.eq.s32.totalorder %s19, 1
      %p161 = por %p159, %p160
      %p162 = scmp.ne.s32.totalorder %s153, %s154
      %p163 = scmp.eq.s32.totalorder %s19, 0
      %p164 = por %p162, %p163
      %p165 = scmp.ne.s32.totalorder %s153, %s154
      %p166 = scmp.eq.s32.totalorder %s20, 1
      %p167 = por %p165, %p166
      %p169 = scmp.ne.s32.totalorder %s154, %s168
      %p170 = scmp.eq.s32.totalorder %s20, 0
      %p171 = por %p169, %p170
      %s172 = ssub.s32 %s21, %s33
      %s173 = ssub.s32 %s22, %s29
      %s174 = sor.u32 %s172, %s173
      %p175 = scmp.eq.s32.totalorder %s174, 0
      %s177 = sadd.s32 %s176, 1
      %s178 = scalar_select %p175, %s176, %s177
      %p181 = pneg %p175
      %p182 = scmp.eq.s32.totalorder %s14, 1
      %p183 = por %p181, %p182
      %p184 = scmp.ne.s32.totalorder %s176, %s179
      %p185 = scmp.eq.s32.totalorder %s14, 0
      %p186 = por %p184, %p185
      %p187 = scmp.ne.s32.totalorder %s176, %s179
      %p188 = scmp.eq.s32.totalorder %s19, 1
      %p189 = por %p187, %p188
      %p190 = scmp.ne.s32.totalorder %s179, %s180
      %p191 = scmp.eq.s32.totalorder %s19, 0
      %p192 = por %p190, %p191
      %p193 = scmp.ne.s32.totalorder %s179, %s180
      %p194 = scmp.eq.s32.totalorder %s20, 1
      %p195 = por %p193, %p194
      %p197 = scmp.ne.s32.totalorder %s180, %s196
      %p198 = scmp.eq.s32.totalorder %s20, 0
      %p199 = por %p197, %p198
      %p200 = scmp.le.s32.totalorder 1, %s14
      %p201 = scmp.lt.s32.totalorder %s14, 3
      %p202 = pnand %p200, %p201
      %p203 = pneg %p202
      // Predicated region
      $region9: #{tpu_custom_call.1} parent=5 // pred_check
        _
      $region10: #{tpu_custom_call.1} parent=5 // pred_check_branch
        %205 = sbr.rel (%p202) target = $region12
      $region11: #{tpu_custom_call.1} parent=5 // pred_region
        %s206 = ssub.s32 %s14, 1
        // Predicated region
        $region13: #{tpu_custom_call.1} parent=11 // pred_check
          %p207 = pneg %p143
        $region14: #{tpu_custom_call.1} parent=11 // pred_check_branch
          %209 = sbr.rel (%p207) target = $region16
        $region15: #{tpu_custom_call.1} parent=11 // pred_region
          _
        $region16: #{tpu_custom_call.1} parent=11 // pred_fallthru
          _
        // Predicated region
        $region17: #{tpu_custom_call.1} parent=11 // pred_check
          %p210 = pneg %p164
        $region18: #{tpu_custom_call.1} parent=11 // pred_check_branch
          %212 = sbr.rel (%p210) target = $region20
        $region19: #{tpu_custom_call.1} parent=11 // pred_region
          _
        $region20: #{tpu_custom_call.1} parent=11 // pred_fallthru
          _
      $region12: #{tpu_custom_call.1} parent=5 // pred_fallthru
        _
      %p213 = scmp.lt.s32.totalorder %s14, 2
      // Predicated region
      $region21: #{tpu_custom_call.1} parent=5 // pred_check
        %p214 = pneg %p213
      $region22: #{tpu_custom_call.1} parent=5 // pred_check_branch
        %216 = sbr.rel (%p214) target = $region24
      $region23: #{tpu_custom_call.1} parent=5 // pred_region
        // Predicated region
        $region25: #{tpu_custom_call.1} parent=23 // pred_check
          %p217 = pneg %p54
        $region26: #{tpu_custom_call.1} parent=23 // pred_check_branch
          %219 = sbr.rel (%p217) target = $region28
        $region27: #{tpu_custom_call.1} parent=23 // pred_region
          %s220 = ssub.s32 %s22, 1
          %p221 = scmp.gt.s32.totalorder %s220, 0
          %s222 = scalar_select %p221, %s220, 0
          %p223 = scmp.lt.s32.totalorder %s21, 1
          %s224 = scalar_select %p223, %s21, 1
          %p225 = scmp.lt.s32.totalorder %s222, 0
          %s226 = scalar_select %p225, %s222, 0
          %s227 = sadd.s32 %s226, %s224
          %s228 = smul.addr %s227, 4
          %s229 = scalar_lea.vmem %s0, %s228
          %s230 = ssub.s32 %s22, 1
          %p231 = scmp.gt.s32.totalorder %s230, 0
          %s232 = scalar_select %p231, %s230, 0
        $region28: #{tpu_custom_call.1} parent=23 // pred_fallthru
          _
        // Predicated region
        $region29: #{tpu_custom_call.1} parent=23 // pred_check
          %p233 = pneg %p82
        $region30: #{tpu_custom_call.1} parent=23 // pred_check_branch
          %235 = sbr.rel (%p233) target = $region32
        $region31: #{tpu_custom_call.1} parent=23 // pred_region
          %p236 = scmp.lt.s32.totalorder %s21, 1
          %s237 = scalar_select %p236, %s21, 1
          %p238 = scmp.lt.s32.totalorder %s22, 0
          %s239 = scalar_select %p238, %s22, 0
          %s240 = sadd.s32 %s239, %s237
          %s241 = smul.addr %s240, 4
          %s242 = scalar_lea.vmem %s1, %s241
        $region32: #{tpu_custom_call.1} parent=23 // pred_fallthru
          _
        // Predicated region
        $region33: #{tpu_custom_call.1} parent=23 // pred_check
          %p243 = pneg %p116
        $region34: #{tpu_custom_call.1} parent=23 // pred_check_branch
          %245 = sbr.rel (%p243) target = $region36
        $region35: #{tpu_custom_call.1} parent=23 // pred_region
          %s246 = sadd.s32 %s22, 1
          %p247 = scmp.lt.s32.totalorder %s246, 0
          %s248 = scalar_select %p247, %s246, 0
          %p249 = scmp.lt.s32.totalorder %s21, 1
          %s250 = scalar_select %p249, %s21, 1
          %p251 = scmp.lt.s32.totalorder %s248, 0
          %s252 = scalar_select %p251, %s248, 0
          %s253 = sadd.s32 %s252, %s250
          %s254 = smul.addr %s253, 4
          %s255 = scalar_lea.vmem %s2, %s254
          %s256 = sadd.s32 %s22, 1
          %p257 = scmp.lt.s32.totalorder %s256, 0
          %s258 = scalar_select %p257, %s256, 0
        $region36: #{tpu_custom_call.1} parent=23 // pred_fallthru
          _
      $region24: #{tpu_custom_call.1} parent=5 // pred_fallthru
        _
      %p259 = scmp.le.s32.totalorder 1, %s14
      %p260 = scmp.lt.s32.totalorder %s14, 3
      %p261 = pnand %p259, %p260
      %p262 = pneg %p261
      // Predicated region
      $region37: #{tpu_custom_call.1} parent=5 // pred_check
        _
      $region38: #{tpu_custom_call.1} parent=5 // pred_check_branch
        %264 = sbr.rel (%p261) target = $region40
      $region39: #{tpu_custom_call.1} parent=5 // pred_region
        %s265 = ssub.s32 %s14, 1
        %s266 = ssub.s32 %s24, 1
        %p267 = scmp.gt.s32.totalorder %s266, 0
        %s268 = scalar_select %p267, %s266, 0
        %p269 = scmp.lt.s32.totalorder %s23, 1
        %s270 = scalar_select %p269, %s23, 1
        %p271 = scmp.lt.s32.totalorder %s268, 0
        %s272 = scalar_select %p271, %s268, 0
        %s273 = sadd.s32 %s272, %s270
        %s274 = smul.addr %s273, 4
        %s275 = scalar_lea.vmem %s0, %s274
        %p276 = pneg %p60
        %p277 = pneg %p57
        %p278 = scmp.lt.s32.totalorder %s23, 1
        %s279 = scalar_select %p278, %s23, 1
        %p280 = scmp.lt.s32.totalorder %s24, 0
        %s281 = scalar_select %p280, %s24, 0
        %s282 = sadd.s32 %s281, %s279
        %s283 = smul.addr %s282, 4
        %s284 = scalar_lea.vmem %s1, %s283
        %p285 = pneg %p88
        %p286 = pneg %p85
        %s287 = sadd.s32 %s24, 1
        %p288 = scmp.lt.s32.totalorder %s287, 0
        %s289 = scalar_select %p288, %s287, 0
        %p290 = scmp.lt.s32.totalorder %s23, 1
        %s291 = scalar_select %p290, %s23, 1
        %p292 = scmp.lt.s32.totalorder %s289, 0
        %s293 = scalar_select %p292, %s289, 0
        %s294 = sadd.s32 %s293, %s291
        %s295 = smul.addr %s294, 4
        %s296 = scalar_lea.vmem %s2, %s295
        %p297 = pneg %p122
        %p298 = pneg %p119
        %p299 = pneg %p143
        %p300 = pneg %p140
        %p301 = pneg %p164
        %p302 = pneg %p161
        %p303 = pneg %p192
        %p304 = pneg %p189
        %s305 = sand.u32 %s179, 1
        %s306 = scalar_lea.sflag [#allocation4], %s305
        %s307 = sand.u32 %s179, 1
        %s308 = smul.addr %s307, 8
        %s309 = scalar_lea.vmem [#allocation3], %s308
        %s310 = ssub.s32 %s24, 1
        %p311 = scmp.gt.s32.totalorder %s310, 0
        %s312 = scalar_select %p311, %s310, 0
        %p313 = scmp.lt.s32.totalorder %s23, 1
        %s314 = scalar_select %p313, %s23, 1
        %p315 = scmp.lt.s32.totalorder %s312, 0
        %s316 = scalar_select %p315, %s312, 0
        %s317 = sadd.s32 %s316, %s314
        %s318 = smul.addr %s317, 4
        %s319 = scalar_lea.vmem %s0, %s318
        %s320 = ssub.s32 %s24, 1
        %p321 = scmp.gt.s32.totalorder %s320, 0
        %s322 = scalar_select %p321, %s320, 0
        %p323 = scmp.lt.s32.totalorder %s23, 1
        %s324 = scalar_select %p323, %s23, 1
        %p325 = scmp.lt.s32.totalorder %s24, 0
        %s326 = scalar_select %p325, %s24, 0
        %s327 = sadd.s32 %s326, %s324
        %s328 = smul.addr %s327, 4
        %s329 = scalar_lea.vmem %s1, %s328
        %s330 = sadd.s32 %s24, 1
        %p331 = scmp.lt.s32.totalorder %s330, 0
        %s332 = scalar_select %p331, %s330, 0
        %p333 = scmp.lt.s32.totalorder %s23, 1
        %s334 = scalar_select %p333, %s23, 1
        %p335 = scmp.lt.s32.totalorder %s332, 0
        %s336 = scalar_select %p335, %s332, 0
        %s337 = sadd.s32 %s336, %s334
        %s338 = smul.addr %s337, 4
        %s339 = scalar_lea.vmem %s2, %s338
        %s340 = sadd.s32 %s24, 1
        %p341 = scmp.lt.s32.totalorder %s340, 0
        %s342 = scalar_select %p341, %s340, 0
        %v343 = vld [vmem:[%s319] sm:$0xf]
        %344 = vst [vmem:[#allocation2] sm:$0xf] %v343
        %v345 = vld [vmem:[%s329] sm:$0xf]
        %346 = vst [vmem:[#allocation2 + $0x4] sm:$0xf] %v345
        %v347 = vld [vmem:[%s339] sm:$0xf]
        %348 = vst [vmem:[#allocation2 + $0x8] sm:$0xf] %v347
        %p349 = scmp.eq.s32.totalorder %s24, 0
        // Predicated region
        $region41: #{tpu_custom_call.1} parent=39 // pred_check
          %p350 = pneg %p349
        $region42: #{tpu_custom_call.1} parent=39 // pred_check_branch
          %352 = sbr.rel (%p350) target = $region44
        $region43: #{tpu_custom_call.1} parent=39 // pred_region
          %353 = vst [vmem:[#allocation2] sm:$0xf] 0.0
        $region44: #{tpu_custom_call.1} parent=39 // pred_fallthru
          _
        %s354 = smul.u32 %s24, 128
        %s355 = sadd.s32 %s354, 256
        %p356 = scmp.gt.s32.totalorder %s355, 16
        // Predicated region
        $region45: #{tpu_custom_call.1} parent=39 // pred_check
          %p357 = pneg %p356
        $region46: #{tpu_custom_call.1} parent=39 // pred_check_branch
          %359 = sbr.rel (%p357) target = $region48
        $region47: #{tpu_custom_call.1} parent=39 // pred_region
          %v360 = vlaneseq
          %v361 = vand.u32 %v360, 127
          %v362 = vadd.s32 %v361, 128
          %v363 = vadd.s32 %v361, 256
          %s364 = ssub.s32 144, %s354
          %v365 = vstv %s364
          %vm366 = vcmp.lt.s32.totalorder %v361, %v365
          %vm367 = vcmp.lt.s32.totalorder %v362, %v365
          %vm368 = vcmp.lt.s32.totalorder %v363, %v365
          %v369 = vld [vmem:[#allocation2] sm:$0xff]
          %v370 = vld [vmem:[#allocation2 + $0x8] sm:$0xf]
          %v372 = vcombine.high %v369, %v369
          %v374 = vsel %vm366, %v369, 0.0
          %v375 = vsel %vm367, %v372, 0.0
          %v376 = vsel %vm368, %v370, 0.0
          %v379 = vcombine.low %v374, %v375
          %381 = vst [vmem:[#allocation2] sm:$0xff] %v379
          %382 = vst [vmem:[#allocation2 + $0x8] sm:$0xf] %v376
        $region48: #{tpu_custom_call.1} parent=39 // pred_fallthru
          _
        %v383 = vld [vmem:[%s3] sm:$0xff]
        %v384 = vld [vmem:[#allocation2] sm:$0xff]
        %s385 = scalar_lea.vmem %s3, 8
        %v386 = vld [vmem:[%s385] sm:$0xff]
        %v387 = vld [vmem:[#allocation2 + $0x4] sm:$0xf]
        %vm388 = vcmask 31744
        %v390 = vsel %vm388, %v386, 0
        %vm392 = vcmask 1043456
        %v394 = vsel %vm392, %v387, 0
        %396 = vmatprep.subr.mxu0 0.0
        %397 = vmatpush1.msra.mxu0 %v394
        %398 = vmatprep.subr.mxu0 0.0
        %399 = vmatpush1.msra.mxu0 0.0
        %400 = vmatprep.subr.mxu0 0.0
        %401 = vmatpush1.msra.mxu0 0.0
        %402 = vmatprep.subr.mxu0 0.0
        %403 = vmatpush1.msra.mxu0 0.0
        %404 = vmatprep.subr.mxu0 0.0
        %405 = vmatpush1.msra.mxu0 0.0
        %406 = vmatprep.subr.mxu0 0.0
        %407 = vmatpush1.msra.mxu0 0.0
        %408 = vmatprep.subr.mxu0 0.0
        %409 = vmatpush1.msra.mxu0 0.0
        %410 = vmatprep.subr.mxu0 0.0
        %411 = vmatpush1.msra.mxu0 0.0
        %412 = vmatprep.subr.mxu0 0.0
        %413 = vmatpush1.msra.mxu0 0.0
        %414 = vmatprep.subr.mxu0 0.0
        %415 = vmatpush1.msra.mxu0 0.0
        %416 = vmatprep.subr.mxu0 0.0
        %417 = vmatpush1.msra.mxu0 0.0
        %418 = vmatprep.subr.mxu0 0.0
        %419 = vmatpush1.msra.mxu0 0.0
        %420 = vmatprep.subr.mxu0 0.0
        %421 = vmatpush1.msra.mxu0 0.0
        %422 = vmatprep.subr.mxu0 0.0
        %423 = vmatpush1.msra.mxu0 0.0
        %424 = vmatprep.subr.mxu0 0.0
        %425 = vmatpush1.msra.mxu0 0.0
        %426 = vmatprep.subr.mxu0 0.0
        %427 = vmatpush1.msra.mxu0 0.0
        %428 = vmatprep.subr.mxu0 0.0
        %429 = vmatpush1.msra.mxu0 0.0
        %430 = vmatprep.subr.mxu0 0.0
        %431 = vmatpush1.msra.mxu0 0.0
        %432 = vmatprep.subr.mxu0 0.0
        %433 = vmatpush1.msra.mxu0 0.0
        %434 = vmatprep.subr.mxu0 0.0
        %435 = vmatpush1.msra.mxu0 0.0
        %436 = vmatprep.subr.mxu0 0.0
        %437 = vmatpush1.msra.mxu0 0.0
        %438 = vmatprep.subr.mxu0 0.0
        %439 = vmatpush1.msra.mxu0 0.0
        %440 = vmatprep.subr.mxu0 0.0
        %441 = vmatpush1.msra.mxu0 0.0
        %442 = vmatprep.subr.mxu0 0.0
        %443 = vmatpush1.msra.mxu0 0.0
        %444 = vmatprep.subr.mxu0 0.0
        %445 = vmatpush1.msra.mxu0 0.0
        %446 = vmatprep.subr.mxu0 0.0
        %447 = vmatpush1.msra.mxu0 0.0
        %448 = vmatprep.subr.mxu0 0.0
        %449 = vmatpush1.msra.mxu0 0.0
        %450 = vmatprep.subr.mxu0 0.0
        %451 = vmatpush1.msra.mxu0 0.0
        %452 = vmatprep.subr.mxu0 0.0
        %453 = vmatpush1.msra.mxu0 0.0
        %454 = vmatprep.subr.mxu0 0.0
        %455 = vmatpush1.msra.mxu0 0.0
        %456 = vmatprep.subr.mxu0 0.0
        %457 = vmatpush1.msra.mxu0 0.0
        %458 = vmatprep.subr.mxu0 0.0
        %459 = vmatpush1.msra.mxu0 0.0
        %460 = vmatprep.mubr.f32.mxu0 0.0
        %461 = vmatmul.mubr.f32.gmra.mrb[0].mxu0 %v390
        %v462 = vpop.f32.mrb[0].mxu0
        %v463 = vadd.f32 0.0, %v462
        %v464 = vpop.f32.mrb[0].mxu0
        %465 = vdwg.mxu0
        %v467 = vcombine.high %v384, %v384
        %468 = vrot.lane.b32.xlu0 %v384, 1
        %v469 = vpop.permute.xlu0 %468
        %470 = vrot.lane.b32.xlu0 %v467, 1
        %v471 = vpop.permute.xlu0 %470
        %vm472 = vcmask 7168
        %v473 = vsel %vm472, %v469, %v471
        %v475 = vsel %vm388, %v383, 0
        %v477 = vsel %vm392, %v473, 0
        %479 = vmatprep.subr.mxu0 0.0
        %480 = vmatpush1.msra.mxu0 %v477
        %481 = vmatprep.subr.mxu0 0.0
        %482 = vmatpush1.msra.mxu0 0.0
        %483 = vmatprep.subr.mxu0 0.0
        %484 = vmatpush1.msra.mxu0 0.0
        %485 = vmatprep.subr.mxu0 0.0
        %486 = vmatpush1.msra.mxu0 0.0
        %487 = vmatprep.subr.mxu0 0.0
        %488 = vmatpush1.msra.mxu0 0.0
        %489 = vmatprep.subr.mxu0 0.0
        %490 = vmatpush1.msra.mxu0 0.0
        %491 = vmatprep.subr.mxu0 0.0
        %492 = vmatpush1.msra.mxu0 0.0
        %493 = vmatprep.subr.mxu0 0.0
        %494 = vmatpush1.msra.mxu0 0.0
        %495 = vmatprep.subr.mxu0 0.0
        %496 = vmatpush1.msra.mxu0 0.0
        %497 = vmatprep.subr.mxu0 0.0
        %498 = vmatpush1.msra.mxu0 0.0
        %499 = vmatprep.subr.mxu0 0.0
        %500 = vmatpush1.msra.mxu0 0.0
        %501 = vmatprep.subr.mxu0 0.0
        %502 = vmatpush1.msra.mxu0 0.0
        %503 = vmatprep.subr.mxu0 0.0
        %504 = vmatpush1.msra.mxu0 0.0
        %505 = vmatprep.subr.mxu0 0.0
        %506 = vmatpush1.msra.mxu0 0.0
        %507 = vmatprep.subr.mxu0 0.0
        %508 = vmatpush1.msra.mxu0 0.0
        %509 = vmatprep.subr.mxu0 0.0
        %510 = vmatpush1.msra.mxu0 0.0
        %511 = vmatprep.subr.mxu0 0.0
        %512 = vmatpush1.msra.mxu0 0.0
        %513 = vmatprep.subr.mxu0 0.0
        %514 = vmatpush1.msra.mxu0 0.0
        %515 = vmatprep.subr.mxu0 0.0
        %516 = vmatpush1.msra.mxu0 0.0
        %517 = vmatprep.subr.mxu0 0.0
        %518 = vmatpush1.msra.mxu0 0.0
        %519 = vmatprep.subr.mxu0 0.0
        %520 = vmatpush1.msra.mxu0 0.0
        %521 = vmatprep.subr.mxu0 0.0
        %522 = vmatpush1.msra.mxu0 0.0
        %523 = vmatprep.subr.mxu0 0.0
        %524 = vmatpush1.msra.mxu0 0.0
        %525 = vmatprep.subr.mxu0 0.0
        %526 = vmatpush1.msra.mxu0 0.0
        %527 = vmatprep.subr.mxu0 0.0
        %528 = vmatpush1.msra.mxu0 0.0
        %529 = vmatprep.subr.mxu0 0.0
        %530 = vmatpush1.msra.mxu0 0.0
        %531 = vmatprep.subr.mxu0 0.0
        %532 = vmatpush1.msra.mxu0 0.0
        %533 = vmatprep.subr.mxu0 0.0
        %534 = vmatpush1.msra.mxu0 0.0
        %535 = vmatprep.subr.mxu0 0.0
        %536 = vmatpush1.msra.mxu0 0.0
        %537 = vmatprep.subr.mxu0 0.0
        %538 = vmatpush1.msra.mxu0 0.0
        %539 = vmatprep.subr.mxu0 0.0
        %540 = vmatpush1.msra.mxu0 0.0
        %541 = vmatprep.subr.mxu0 0.0
        %542 = vmatpush1.msra.mxu0 0.0
        %543 = vmatprep.mubr.f32.mxu0 0.0
        %544 = vmatmul.mubr.f32.gmra.mrb[0].mxu0 %v475
        %v545 = vpop.f32.mrb[0].mxu0
        %v546 = vadd.f32 %v463, %v545
        %v547 = vpop.f32.mrb[0].mxu0
        %548 = vdwg.mxu0
        %s549 = scalar_lea.vmem %s3, 16
        %v550 = vld [vmem:[%s549] sm:$0xff]
        %v551 = vld [vmem:[#allocation2 + $0x4] sm:$0xff]
        %v553 = vcombine.high %v551, %v551
        %554 = vrot.lane.b32.xlu0 %v551, 127
        %v555 = vpop.permute.xlu0 %554
        %556 = vrot.lane.b32.xlu0 %v553, 127
        %v557 = vpop.permute.xlu0 %556
        %vm558 = vcmask 1039360
        %v559 = vsel %vm558, %v555, %v557
        %v561 = vsel %vm388, %v550, 0
        %v563 = vsel %vm392, %v559, 0
        %565 = vmatprep.subr.mxu0 0.0
        %566 = vmatpush1.msra.mxu0 %v563
        %567 = vmatprep.subr.mxu0 0.0
        %568 = vmatpush1.msra.mxu0 0.0
        %569 = vmatprep.subr.mxu0 0.0
        %570 = vmatpush1.msra.mxu0 0.0
        %571 = vmatprep.subr.mxu0 0.0
        %572 = vmatpush1.msra.mxu0 0.0
        %573 = vmatprep.subr.mxu0 0.0
        %574 = vmatpush1.msra.mxu0 0.0
        %575 = vmatprep.subr.mxu0 0.0
        %576 = vmatpush1.msra.mxu0 0.0
        %577 = vmatprep.subr.mxu0 0.0
        %578 = vmatpush1.msra.mxu0 0.0
        %579 = vmatprep.subr.mxu0 0.0
        %580 = vmatpush1.msra.mxu0 0.0
        %581 = vmatprep.subr.mxu0 0.0
        %582 = vmatpush1.msra.mxu0 0.0
        %583 = vmatprep.subr.mxu0 0.0
        %584 = vmatpush1.msra.mxu0 0.0
        %585 = vmatprep.subr.mxu0 0.0
        %586 = vmatpush1.msra.mxu0 0.0
        %587 = vmatprep.subr.mxu0 0.0
        %588 = vmatpush1.msra.mxu0 0.0
        %589 = vmatprep.subr.mxu0 0.0
        %590 = vmatpush1.msra.mxu0 0.0
        %591 = vmatprep.subr.mxu0 0.0
        %592 = vmatpush1.msra.mxu0 0.0
        %593 = vmatprep.subr.mxu0 0.0
        %594 = vmatpush1.msra.mxu0 0.0
        %595 = vmatprep.subr.mxu0 0.0
        %596 = vmatpush1.msra.mxu0 0.0
        %597 = vmatprep.subr.mxu0 0.0
        %598 = vmatpush1.msra.mxu0 0.0
        %599 = vmatprep.subr.mxu0 0.0
        %600 = vmatpush1.msra.mxu0 0.0
        %601 = vmatprep.subr.mxu0 0.0
        %602 = vmatpush1.msra.mxu0 0.0
        %603 = vmatprep.subr.mxu0 0.0
        %604 = vmatpush1.msra.mxu0 0.0
        %605 = vmatprep.subr.mxu0 0.0
        %606 = vmatpush1.msra.mxu0 0.0
        %607 = vmatprep.subr.mxu0 0.0
        %608 = vmatpush1.msra.mxu0 0.0
        %609 = vmatprep.subr.mxu0 0.0
        %610 = vmatpush1.msra.mxu0 0.0
        %611 = vmatprep.subr.mxu0 0.0
        %612 = vmatpush1.msra.mxu0 0.0
        %613 = vmatprep.subr.mxu0 0.0
        %614 = vmatpush1.msra.mxu0 0.0
        %615 = vmatprep.subr.mxu0 0.0
        %616 = vmatpush1.msra.mxu0 0.0
        %617 = vmatprep.subr.mxu0 0.0
        %618 = vmatpush1.msra.mxu0 0.0
        %619 = vmatprep.subr.mxu0 0.0
        %620 = vmatpush1.msra.mxu0 0.0
        %621 = vmatprep.subr.mxu0 0.0
        %622 = vmatpush1.msra.mxu0 0.0
        %623 = vmatprep.subr.mxu0 0.0
        %624 = vmatpush1.msra.mxu0 0.0
        %625 = vmatprep.subr.mxu0 0.0
        %626 = vmatpush1.msra.mxu0 0.0
        %627 = vmatprep.subr.mxu0 0.0
        %628 = vmatpush1.msra.mxu0 0.0
        %629 = vmatprep.mubr.f32.mxu0 0.0
        %630 = vmatmul.mubr.f32.gmra.mrb[0].mxu0 %v561
        %v631 = vpop.f32.mrb[0].mxu0
        %v632 = vadd.f32 0.0, %v631
        %v633 = vpop.f32.mrb[0].mxu0
        %634 = vdwg.mxu0
        %v635 = vadd.f32 %v546, %v632
        %v636 = vld [vmem:[%s4] sm:$0xff]
        %638 = vset.pattern.permute.xlu0 0
        %639 = vperm.xlu0 %638, %v636
        %v640 = vpop.permute.xlu0 %639
        %v642 = vadd.f32 %v635, %v640
        %643 = vst [vmem:[%s309] sm:$0xff] %v642
        %s644 = sand.u32 %s179, 1
        %s645 = scalar_lea.sflag [#allocation4], %s644
        %s646 = sand.u32 %s179, 1
        %s647 = smul.addr %s646, 8
        %s648 = scalar_lea.vmem [#allocation3], %s647
        // Predicated region
        $region49: #{tpu_custom_call.1} parent=39 // pred_check
          %p649 = pneg %p189
        $region50: #{tpu_custom_call.1} parent=39 // pred_check_branch
          %651 = sbr.rel (%p649) target = $region52
        $region51: #{tpu_custom_call.1} parent=39 // pred_region
          %s653 = ssub.s32 128, 128
          %654 = vsyncadd %s645, %s653
          %s655 = sadd.s32 %s24, %s23
          %s656 = smul.addr %s655, 128
          %s657 = scalar_lea.hbm %s5, %s656
          %s659 = sshll.u32 %s648, 4
          %s660 = int_to_ptr.vmem [resolvable:$true] %s659
          %662 = dma.vmem_to_hbm [thread:$0]  %s660, 128, %s657, %s645
        $region52: #{tpu_custom_call.1} parent=39 // pred_fallthru
          _
      $region40: #{tpu_custom_call.1} parent=5 // pred_fallthru
        _
      %p663 = scmp.le.s32.totalorder 2, %s14
      // Predicated region
      $region53: #{tpu_custom_call.1} parent=5 // pred_check
        %p664 = pneg %p663
      $region54: #{tpu_custom_call.1} parent=5 // pred_check_branch
        %666 = sbr.rel (%p664) target = $region56
      $region55: #{tpu_custom_call.1} parent=5 // pred_region
        %s667 = ssub.s32 %s14, 2
        // Predicated region
        $region57: #{tpu_custom_call.1} parent=55 // pred_check
          %p668 = pneg %p195
        $region58: #{tpu_custom_call.1} parent=55 // pred_check_branch
          %670 = sbr.rel (%p668) target = $region60
        $region59: #{tpu_custom_call.1} parent=55 // pred_region
          %s671 = sand.u32 %s180, 1
          %s672 = scalar_lea.sflag [#allocation4], %s671
          %s673 = sand.u32 %s180, 1
          %s674 = smul.addr %s673, 8
          %s675 = scalar_lea.vmem [#allocation3], %s674
          %676 = dma.done %s672, 128
        $region60: #{tpu_custom_call.1} parent=55 // pred_fallthru
          _
      $region56: #{tpu_custom_call.1} parent=5 // pred_fallthru
        _
    $region6: #{tpu_custom_call.1} parent=1 // loop_footer
      %s18 = sadd.s32 1, %s14
    $region7: #{tpu_custom_call.1} parent=1 // loop_footer_branch
      %13 = sbr.rel target = $region3
    $region8: #{tpu_custom_call.1} parent=1 // loop_exit
      _
    %677 = vsyncpa [#allocation4], 1
    %s678 = scalar_lea.sflag [#allocation4], 1
    %679 = vsyncpa %s678, 1

</llo_original>
